<compile_context>
chip_gen: v7x
topology: tpu7x:2x2x1
jax: 0.10.0
libtpu: 0.0.40
codegen_flags: <defaults>
</compile_context>

<pallas_src>
import functools

import jax
import jax.numpy as jnp
from jax.experimental import pallas as pl
from jax.experimental.pallas import tpu as pltpu

_LANE = 128


def _round_up(n, m):
    return ((n + m - 1) // m) * m


def autoencoder_kernel(x_ref,
                       w1_ref, b1_ref,
                       w2_ref, b2_ref,
                       w3_ref, b3_ref,
                       w4_ref, b4_ref,
                       o_ref):
    """Fused forward pass for one batch tile (all weights resident in VMEM)."""
    cdt = w1_ref.dtype                      # MXU operand dtype (bf16 or f32)

    # Hoist bias reads once per tile (biases stay f32 for accurate adds).
    b1 = b1_ref[...]
    b2 = b2_ref[...]
    b3 = b3_ref[...]
    b4 = b4_ref[...]

    x = x_ref[...]                          # already in compute dtype

    # encode: fc1 -> relu -> fc2 -> relu   (f32 accumulation on the MXU)
    h = jnp.dot(x, w1_ref[...], preferred_element_type=jnp.float32) + b1
    h = jnp.maximum(h, 0.0).astype(cdt)
    h = jnp.dot(h, w2_ref[...], preferred_element_type=jnp.float32) + b2
    h = jnp.maximum(h, 0.0).astype(cdt)

    # decode: fc3 -> relu -> fc4 -> sigmoid
    h = jnp.dot(h, w3_ref[...], preferred_element_type=jnp.float32) + b3
    h = jnp.maximum(h, 0.0).astype(cdt)
    y = jnp.dot(h, w4_ref[...], preferred_element_type=jnp.float32) + b4

    o_ref[...] = jax.nn.sigmoid(y).astype(o_ref.dtype)


@functools.partial(jax.jit, static_argnames=("tile_b", "compute_dtype"))
def autoencoder_forward(x, params, *, tile_b=256, compute_dtype=jnp.bfloat16):
    """x: [B, input_size] float32.  params: dict of (W[in,out], b[1,out]) pairs."""
    B, F = x.shape
    (w1, b1), (w2, b2), (w3, b3), (w4, b4) = (
        params["fc1"], params["fc2"], params["fc3"], params["fc4"])

    # Sublane multiple for the chosen operand dtype; clamp tile to (padded) batch.
    sub = 16 if compute_dtype == jnp.bfloat16 else 8
    tile_b = _round_up(max(sub, min(tile_b, _round_up(B, sub))), sub)
    B_pad = _round_up(B, tile_b)

    # Lane-pad all feature dims to multiples of 128 (lane-dense loads/stores).
    F_pad = _round_up(F, _LANE)
    E_pad = _round_up(w1.shape[1], _LANE)
    M_pad = _round_up(w2.shape[1], _LANE)

    def pad_w(w, rows, cols):
        return jnp.pad(w, ((0, rows - w.shape[0]),
                           (0, cols - w.shape[1]))).astype(compute_dtype)

    def pad_b(b, cols):
        return jnp.pad(b, ((0, 0), (0, cols - b.shape[1]))).astype(jnp.float32)

    w1p, b1p = pad_w(w1, F_pad, E_pad), pad_b(b1, E_pad)
    w2p, b2p = pad_w(w2, E_pad, M_pad), pad_b(b2, M_pad)
    w3p, b3p = pad_w(w3, M_pad, E_pad), pad_b(b3, E_pad)
    w4p, b4p = pad_w(w4, E_pad, F_pad), pad_b(b4, F_pad)

    xp = jnp.pad(x, ((0, B_pad - B), (0, F_pad - F))).astype(compute_dtype)

    def const_spec(arr):
        # whole (small) weight / bias tile, identical for every grid step
        return pl.BlockSpec(arr.shape, lambda i: (0, 0))

    grid = (B_pad // tile_b,)
    out = pl.pallas_call(
        autoencoder_kernel,
        out_shape=jax.ShapeDtypeStruct((B_pad, F_pad), jnp.float32),
        grid_spec=pltpu.PrefetchScalarGridSpec(
            num_scalar_prefetch=0,
            grid=grid,
            in_specs=[
                pl.BlockSpec((tile_b, F_pad), lambda i: (i, 0)),  # x tile
                const_spec(w1p), const_spec(b1p),
                const_spec(w2p), const_spec(b2p),
                const_spec(w3p), const_spec(b3p),
                const_spec(w4p), const_spec(b4p),
            ],
            out_specs=pl.BlockSpec((tile_b, F_pad), lambda i: (i, 0)),
        ),
        compiler_params=pltpu.CompilerParams(
            dimension_semantics=("parallel",)),
    )(xp, w1p, b1p, w2p, b2p, w3p, b3p, w4p, b4p)

    return out[:B, :F]


def init_linear(key, in_features, out_features):
    """PyTorch nn.Linear-style init: U(-1/sqrt(in), 1/sqrt(in)).
    Returns W already transposed to [in, out] plus bias [1, out] (f32)."""
    kw, kb = jax.random.split(key)
    bound = 1.0 / jnp.sqrt(jnp.asarray(in_features, jnp.float32))
    w = jax.random.uniform(kw, (in_features, out_features), jnp.float32,
                           minval=-bound, maxval=bound)
    b = jax.random.uniform(kb, (1, out_features), jnp.float32,
                           minval=-bound, maxval=bound)
    return w, b


def init_autoencoder_params(key, input_size, encode=100, middle=25):
    k1, k2, k3, k4 = jax.random.split(key, 4)
    return {
        "fc1": init_linear(k1, input_size, encode),
        "fc2": init_linear(k2, encode, middle),
        "fc3": init_linear(k3, middle, encode),
        "fc4": init_linear(k4, encode, input_size),
    }


def reference_forward(x, params):
    """Pure-JAX f32 reference (matches PyTorch forward semantics)."""
    (w1, b1), (w2, b2), (w3, b3), (w4, b4) = (
        params["fc1"], params["fc2"], params["fc3"], params["fc4"])
    h = jnp.maximum(x @ w1 + b1, 0.0)
    h = jnp.maximum(h @ w2 + b2, 0.0)
    h = jnp.maximum(h @ w3 + b3, 0.0)
    return jax.nn.sigmoid(h @ w4 + b4)


if __name__ == "__main__":
    key = jax.random.PRNGKey(0)
    k_params, k_x = jax.random.split(key)

    batch = 256          # 2 grid steps at tile_b=128 -> spans both v7x cores
    input_size = 64      # flattened feature vector fed to the autoencoder
    encode_size = 100    # module default
    middle_size = 25     # module default

    params = init_autoencoder_params(k_params, input_size,
                                     encode=encode_size, middle=middle_size)
    x = jax.random.normal(k_x, (batch, input_size), jnp.float32)

    y_ref = reference_forward(x, params)

    # Exact-semantics validation path (f32 MXU operands).
    y_f32 = autoencoder_forward(x, params, tile_b=128,
                                compute_dtype=jnp.float32)
    y_f32 = jax.block_until_ready(y_f32)
    assert y_f32.shape == (batch, input_size)
    assert jnp.max(jnp.abs(y_f32 - y_ref)) < 1e-5, "f32 path mismatch vs reference"

    # Fast path: bf16 MXU operands, f32 accumulation.
    y_bf16 = autoencoder_forward(x, params, tile_b=128,
                                 compute_dtype=jnp.bfloat16)
    y_bf16 = jax.block_until_ready(y_bf16)
    assert y_bf16.shape == (batch, input_size)
    assert jnp.max(jnp.abs(y_bf16 - y_ref)) < 3e-2, "bf16 path mismatch vs reference"

    print("KERNEL_OK")
</pallas_src>

<mosaic_0001>
module attributes {stable_mosaic.version = 11 : i64} {
  func.func @autoencoder_kernel(%arg0: i32, %arg1: memref<128x128xf32, #tpu.memory_space<vmem>>, %arg2: memref<128x128xf32, #tpu.memory_space<vmem>>, %arg3: memref<1x128xf32, #tpu.memory_space<vmem>>, %arg4: memref<128x128xf32, #tpu.memory_space<vmem>>, %arg5: memref<1x128xf32, #tpu.memory_space<vmem>>, %arg6: memref<128x128xf32, #tpu.memory_space<vmem>>, %arg7: memref<1x128xf32, #tpu.memory_space<vmem>>, %arg8: memref<128x128xf32, #tpu.memory_space<vmem>>, %arg9: memref<1x128xf32, #tpu.memory_space<vmem>>, %arg10: memref<128x128xf32, #tpu.memory_space<vmem>>) attributes {dimension_semantics = [#tpu.dimension_semantics<parallel>], iteration_bounds = array<i64: 2>, scalar_prefetch = 0 : i64, scratch_operands = 0 : i64, tpu.core_type = #tpu.core_type<tc>, window_params = [{transform_indices = @transform_0, window_bounds = array<i64: 128, 128>}, {pipeline_mode = #tpu.pipeline_mode<synchronous>, transform_indices = @transform_1, window_bounds = array<i64: 128, 128>}, {pipeline_mode = #tpu.pipeline_mode<synchronous>, transform_indices = @transform_2, window_bounds = array<i64: 1, 128>}, {pipeline_mode = #tpu.pipeline_mode<synchronous>, transform_indices = @transform_3, window_bounds = array<i64: 128, 128>}, {pipeline_mode = #tpu.pipeline_mode<synchronous>, transform_indices = @transform_4, window_bounds = array<i64: 1, 128>}, {pipeline_mode = #tpu.pipeline_mode<synchronous>, transform_indices = @transform_5, window_bounds = array<i64: 128, 128>}, {pipeline_mode = #tpu.pipeline_mode<synchronous>, transform_indices = @transform_6, window_bounds = array<i64: 1, 128>}, {pipeline_mode = #tpu.pipeline_mode<synchronous>, transform_indices = @transform_7, window_bounds = array<i64: 128, 128>}, {pipeline_mode = #tpu.pipeline_mode<synchronous>, transform_indices = @transform_8, window_bounds = array<i64: 1, 128>}, {transform_indices = @transform_9, window_bounds = array<i64: 128, 128>}]} {
    %c0 = arith.constant 0 : index
    %c0_0 = arith.constant 0 : index
    %0 = vector.load %arg3[%c0, %c0_0] : memref<1x128xf32, #tpu.memory_space<vmem>>, vector<1x128xf32>
    %c0_1 = arith.constant 0 : index
    %c0_2 = arith.constant 0 : index
    %1 = vector.load %arg5[%c0_1, %c0_2] : memref<1x128xf32, #tpu.memory_space<vmem>>, vector<1x128xf32>
    %c0_3 = arith.constant 0 : index
    %c0_4 = arith.constant 0 : index
    %2 = vector.load %arg7[%c0_3, %c0_4] : memref<1x128xf32, #tpu.memory_space<vmem>>, vector<1x128xf32>
    %c0_5 = arith.constant 0 : index
    %c0_6 = arith.constant 0 : index
    %3 = vector.load %arg9[%c0_5, %c0_6] : memref<1x128xf32, #tpu.memory_space<vmem>>, vector<1x128xf32>
    %c0_7 = arith.constant 0 : index
    %c0_8 = arith.constant 0 : index
    %4 = vector.load %arg1[%c0_7, %c0_8] : memref<128x128xf32, #tpu.memory_space<vmem>>, vector<128x128xf32>
    %c0_9 = arith.constant 0 : index
    %c0_10 = arith.constant 0 : index
    %5 = vector.load %arg2[%c0_9, %c0_10] : memref<128x128xf32, #tpu.memory_space<vmem>>, vector<128x128xf32>
    %cst = arith.constant dense<0.000000e+00> : vector<128x128xf32>
    %6 = tpu.matmul %4, %5, %cst {dimension_numbers = #tpu.dot_dimension_numbers<[1], [0], [0], [1], [0, 0, 1, 1], [], []>} : vector<128x128xf32>, vector<128x128xf32>, vector<128x128xf32> -> vector<128x128xf32>
    %7 = vector.broadcast %0 : vector<1x128xf32> to vector<128x128xf32>
    %8 = arith.addf %6, %7 : vector<128x128xf32>
    %cst_11 = arith.constant 0.000000e+00 : f32
    %9 = vector.broadcast %cst_11 : f32 to vector<128x128xf32>
    %10 = arith.maximumf %8, %9 : vector<128x128xf32>
    %c0_12 = arith.constant 0 : index
    %c0_13 = arith.constant 0 : index
    %11 = vector.load %arg4[%c0_12, %c0_13] : memref<128x128xf32, #tpu.memory_space<vmem>>, vector<128x128xf32>
    %cst_14 = arith.constant dense<0.000000e+00> : vector<128x128xf32>
    %12 = tpu.matmul %10, %11, %cst_14 {dimension_numbers = #tpu.dot_dimension_numbers<[1], [0], [0], [1], [0, 0, 1, 1], [], []>} : vector<128x128xf32>, vector<128x128xf32>, vector<128x128xf32> -> vector<128x128xf32>
    %13 = vector.broadcast %1 : vector<1x128xf32> to vector<128x128xf32>
    %14 = arith.addf %12, %13 : vector<128x128xf32>
    %cst_15 = arith.constant 0.000000e+00 : f32
    %15 = vector.broadcast %cst_15 : f32 to vector<128x128xf32>
    %16 = arith.maximumf %14, %15 : vector<128x128xf32>
    %c0_16 = arith.constant 0 : index
    %c0_17 = arith.constant 0 : index
    %17 = vector.load %arg6[%c0_16, %c0_17] : memref<128x128xf32, #tpu.memory_space<vmem>>, vector<128x128xf32>
    %cst_18 = arith.constant dense<0.000000e+00> : vector<128x128xf32>
    %18 = tpu.matmul %16, %17, %cst_18 {dimension_numbers = #tpu.dot_dimension_numbers<[1], [0], [0], [1], [0, 0, 1, 1], [], []>} : vector<128x128xf32>, vector<128x128xf32>, vector<128x128xf32> -> vector<128x128xf32>
    %19 = vector.broadcast %2 : vector<1x128xf32> to vector<128x128xf32>
    %20 = arith.addf %18, %19 : vector<128x128xf32>
    %cst_19 = arith.constant 0.000000e+00 : f32
    %21 = vector.broadcast %cst_19 : f32 to vector<128x128xf32>
    %22 = arith.maximumf %20, %21 : vector<128x128xf32>
    %c0_20 = arith.constant 0 : index
    %c0_21 = arith.constant 0 : index
    %23 = vector.load %arg8[%c0_20, %c0_21] : memref<128x128xf32, #tpu.memory_space<vmem>>, vector<128x128xf32>
    %cst_22 = arith.constant dense<0.000000e+00> : vector<128x128xf32>
    %24 = tpu.matmul %22, %23, %cst_22 {dimension_numbers = #tpu.dot_dimension_numbers<[1], [0], [0], [1], [0, 0, 1, 1], [], []>} : vector<128x128xf32>, vector<128x128xf32>, vector<128x128xf32> -> vector<128x128xf32>
    %25 = vector.broadcast %3 : vector<1x128xf32> to vector<128x128xf32>
    %26 = arith.addf %24, %25 : vector<128x128xf32>
    %27 = arith.negf %26 : vector<128x128xf32>
    %28 = math.exp %27 : vector<128x128xf32>
    %cst_23 = arith.constant 1.000000e+00 : f32
    %29 = vector.broadcast %cst_23 : f32 to vector<128x128xf32>
    %30 = arith.addf %29, %28 : vector<128x128xf32>
    %31 = arith.divf %29, %30 : vector<128x128xf32>
    %c0_24 = arith.constant 0 : index
    %c0_25 = arith.constant 0 : index
    %32 = vector.load %arg10[%c0_24, %c0_25] : memref<128x128xf32, #tpu.memory_space<vmem>>, vector<128x128xf32>
    tpu.vector_store %arg10[%c0_24, %c0_25], %31 {strides = array<i32>} : memref<128x128xf32, #tpu.memory_space<vmem>>, vector<128x128xf32>,
    return
  }
  func.func @transform_0(%arg0: i32) -> (i32, i32) {
    %c0_i32 = arith.constant 0 : i32
    %c0_i32_0 = arith.constant 0 : i32
    return %arg0, %c0_i32 : i32, i32
  }
  func.func @transform_1(%arg0: i32) -> (i32, i32) {
    %c0_i32 = arith.constant 0 : i32
    %c0_i32_0 = arith.constant 0 : i32
    %c0_i32_1 = arith.constant 0 : i32
    return %c0_i32, %c0_i32_0 : i32, i32
  }
  func.func @transform_2(%arg0: i32) -> (i32, i32) {
    %c0_i32 = arith.constant 0 : i32
    %c0_i32_0 = arith.constant 0 : i32
    %c0_i32_1 = arith.constant 0 : i32
    return %c0_i32, %c0_i32_0 : i32, i32
  }
  func.func @transform_3(%arg0: i32) -> (i32, i32) {
    %c0_i32 = arith.constant 0 : i32
    %c0_i32_0 = arith.constant 0 : i32
    %c0_i32_1 = arith.constant 0 : i32
    return %c0_i32, %c0_i32_0 : i32, i32
  }
  func.func @transform_4(%arg0: i32) -> (i32, i32) {
    %c0_i32 = arith.constant 0 : i32
    %c0_i32_0 = arith.constant 0 : i32
    %c0_i32_1 = arith.constant 0 : i32
    return %c0_i32, %c0_i32_0 : i32, i32
  }
  func.func @transform_5(%arg0: i32) -> (i32, i32) {
    %c0_i32 = arith.constant 0 : i32
    %c0_i32_0 = arith.constant 0 : i32
    %c0_i32_1 = arith.constant 0 : i32
    return %c0_i32, %c0_i32_0 : i32, i32
  }
  func.func @transform_6(%arg0: i32) -> (i32, i32) {
    %c0_i32 = arith.constant 0 : i32
    %c0_i32_0 = arith.constant 0 : i32
    %c0_i32_1 = arith.constant 0 : i32
    return %c0_i32, %c0_i32_0 : i32, i32
  }
  func.func @transform_7(%arg0: i32) -> (i32, i32) {
    %c0_i32 = arith.constant 0 : i32
    %c0_i32_0 = arith.constant 0 : i32
    %c0_i32_1 = arith.constant 0 : i32
    return %c0_i32, %c0_i32_0 : i32, i32
  }
  func.func @transform_8(%arg0: i32) -> (i32, i32) {
    %c0_i32 = arith.constant 0 : i32
    %c0_i32_0 = arith.constant 0 : i32
    %c0_i32_1 = arith.constant 0 : i32
    return %c0_i32, %c0_i32_0 : i32, i32
  }
  func.func @transform_9(%arg0: i32) -> (i32, i32) {
    %c0_i32 = arith.constant 0 : i32
    %c0_i32_0 = arith.constant 0 : i32
    return %arg0, %c0_i32 : i32, i32
  }
}

</mosaic_0001>

<llo_original>
// kernel: autoencoder_forward.1
$region0: #{autoencoder_forward.1}
  #allocation0 [shape = 'u32[]', space=smem, size = 0x4, offset = 0x4, fixed_abs, tag = 'smem constant byte address 0x4 - core index']
  #allocation1 [shape = 'u32[144,128]{1,0:T(1,128)}', space=vmem, size = 0x12000, scoped, tag = 'internal scratch']
  %s0 = inlined_call_operand.vmem [shape: f32[256,128], index: 0, kind: input, shape index: {}]
  %s1 = inlined_call_operand.vmem [shape: f32[128,128], index: 1, kind: input, shape index: {}]
  %s2 = inlined_call_operand.vmem [shape: f32[1,128], index: 2, kind: input, shape index: {}]
  %s3 = inlined_call_operand.vmem [shape: f32[128,128], index: 3, kind: input, shape index: {}]
  %s4 = inlined_call_operand.vmem [shape: f32[1,128], index: 4, kind: input, shape index: {}]
  %s5 = inlined_call_operand.vmem [shape: f32[128,128], index: 5, kind: input, shape index: {}]
  %s6 = inlined_call_operand.vmem [shape: f32[1,128], index: 6, kind: input, shape index: {}]
  %s7 = inlined_call_operand.vmem [shape: f32[128,128], index: 7, kind: input, shape index: {}]
  %s8 = inlined_call_operand.vmem [shape: f32[1,128], index: 8, kind: input, shape index: {}]
  %s9 = inlined_call_operand.vmem [shape: f32[256,128], index: 9, kind: output, shape index: {}]
  %s10 = sld [smem:[#allocation0]]
  $region69: #{autoencoder_forward.1} parent=0
    _
  %s12 = ssub.s32 1, %s10
  %s13 = scalar_select 0, %s12, %s10
  loop: start=0, step=1, limit=4
  $region2: #{autoencoder_forward.1} parent=0 // loop_pre_header
    _
  $region3: #{autoencoder_forward.1} parent=0 // loop_header
    %s15 = sphi 0, %s19
    %p16 = scmp.ge.s32.totalorder %s15, 4
    %s25 = sphi 0, %s27
    %s28 = sphi 0, %s25
    %s29 = sphi 0, %s28
    %s45 = sphi 0, %s29
    %s49 = sphi 0, %s49
    %s51 = sphi 0, %s49
    %s52 = sphi 0, %s51
    %s66 = sphi 0, %s52
    %s70 = sphi 0, %s70
    %s72 = sphi 0, %s70
    %s73 = sphi 0, %s72
    %s87 = sphi 0, %s73
    %s91 = sphi 0, %s91
    %s93 = sphi 0, %s91
    %s94 = sphi 0, %s93
    %s108 = sphi 0, %s94
    %s112 = sphi 0, %s112
    %s114 = sphi 0, %s112
    %s115 = sphi 0, %s114
    %s129 = sphi 0, %s115
    %s133 = sphi 0, %s133
    %s135 = sphi 0, %s133
    %s136 = sphi 0, %s135
    %s150 = sphi 0, %s136
    %s154 = sphi 0, %s154
    %s156 = sphi 0, %s154
    %s157 = sphi 0, %s156
    %s171 = sphi 0, %s157
    %s175 = sphi 0, %s175
    %s177 = sphi 0, %s175
    %s178 = sphi 0, %s177
    %s192 = sphi 0, %s178
    %s196 = sphi 0, %s196
    %s198 = sphi 0, %s196
    %s199 = sphi 0, %s198
    %s213 = sphi 0, %s199
    %s219 = sphi 0, %s221
    %s222 = sphi 0, %s219
    %s223 = sphi 0, %s222
    %s239 = sphi 0, %s223
  $region4: #{autoencoder_forward.1} parent=0 // loop_header_branch
    %18 = sbr.rel (%p16) target = $region8
  $region5: #{autoencoder_forward.1} parent=0 // loop_body
    %s20 = ssub.s32 %s15, 1
    %s21 = ssub.s32 %s15, 2
    %s22 = sadd.s32 %s15, 1
    %s23 = ssub.s32 %s15, %s22
    %p24 = scmp.eq.s32.totalorder %s23, 0
    %s26 = sadd.s32 %s25, 1
    %s27 = scalar_select %p24, %s25, %s26
    %p30 = pneg %p24
    %p31 = scmp.eq.s32.totalorder %s15, 1
    %p32 = por %p30, %p31
    %p33 = scmp.ne.s32.totalorder %s25, %s28
    %p34 = scmp.eq.s32.totalorder %s15, 0
    %p35 = por %p33, %p34
    %p36 = scmp.ne.s32.totalorder %s25, %s28
    %p37 = scmp.eq.s32.totalorder %s20, 1
    %p38 = por %p36, %p37
    %p39 = scmp.ne.s32.totalorder %s28, %s29
    %p40 = scmp.eq.s32.totalorder %s20, 0
    %p41 = por %p39, %p40
    %p42 = scmp.ne.s32.totalorder %s28, %s29
    %p43 = scmp.eq.s32.totalorder %s21, 1
    %p44 = por %p42, %p43
    %p46 = scmp.ne.s32.totalorder %s29, %s45
    %p47 = scmp.eq.s32.totalorder %s21, 0
    %p48 = por %p46, %p47
    %s50 = sadd.s32 %s49, 1
    %p53 = scmp.eq.s32.totalorder %s15, 1
    %p54 = scmp.ne.s32.totalorder %s49, %s51
    %p55 = scmp.eq.s32.totalorder %s15, 0
    %p56 = por %p54, %p55
    %p57 = scmp.ne.s32.totalorder %s49, %s51
    %p58 = scmp.eq.s32.totalorder %s20, 1
    %p59 = por %p57, %p58
    %p60 = scmp.ne.s32.totalorder %s51, %s52
    %p61 = scmp.eq.s32.totalorder %s20, 0
    %p62 = por %p60, %p61
    %p63 = scmp.ne.s32.totalorder %s51, %s52
    %p64 = scmp.eq.s32.totalorder %s21, 1
    %p65 = por %p63, %p64
    %p67 = scmp.ne.s32.totalorder %s52, %s66
    %p68 = scmp.eq.s32.totalorder %s21, 0
    %p69 = por %p67, %p68
    %s71 = sadd.s32 %s70, 1
    %p74 = scmp.eq.s32.totalorder %s15, 1
    %p75 = scmp.ne.s32.totalorder %s70, %s72
    %p76 = scmp.eq.s32.totalorder %s15, 0
    %p77 = por %p75, %p76
    %p78 = scmp.ne.s32.totalorder %s70, %s72
    %p79 = scmp.eq.s32.totalorder %s20, 1
    %p80 = por %p78, %p79
    %p81 = scmp.ne.s32.totalorder %s72, %s73
    %p82 = scmp.eq.s32.totalorder %s20, 0
    %p83 = por %p81, %p82
    %p84 = scmp.ne.s32.totalorder %s72, %s73
    %p85 = scmp.eq.s32.totalorder %s21, 1
    %p86 = por %p84, %p85
    %p88 = scmp.ne.s32.totalorder %s73, %s87
    %p89 = scmp.eq.s32.totalorder %s21, 0
    %p90 = por %p88, %p89
    %s92 = sadd.s32 %s91, 1
    %p95 = scmp.eq.s32.totalorder %s15, 1
    %p96 = scmp.ne.s32.totalorder %s91, %s93
    %p97 = scmp.eq.s32.totalorder %s15, 0
    %p98 = por %p96, %p97
    %p99 = scmp.ne.s32.totalorder %s91, %s93
    %p100 = scmp.eq.s32.totalorder %s20, 1
    %p101 = por %p99, %p100
    %p102 = scmp.ne.s32.totalorder %s93, %s94
    %p103 = scmp.eq.s32.totalorder %s20, 0
    %p104 = por %p102, %p103
    %p105 = scmp.ne.s32.totalorder %s93, %s94
    %p106 = scmp.eq.s32.totalorder %s21, 1
    %p107 = por %p105, %p106
    %p109 = scmp.ne.s32.totalorder %s94, %s108
    %p110 = scmp.eq.s32.totalorder %s21, 0
    %p111 = por %p109, %p110
    %s113 = sadd.s32 %s112, 1
    %p116 = scmp.eq.s32.totalorder %s15, 1
    %p117 = scmp.ne.s32.totalorder %s112, %s114
    %p118 = scmp.eq.s32.totalorder %s15, 0
    %p119 = por %p117, %p118
    %p120 = scmp.ne.s32.totalorder %s112, %s114
    %p121 = scmp.eq.s32.totalorder %s20, 1
    %p122 = por %p120, %p121
    %p123 = scmp.ne.s32.totalorder %s114, %s115
    %p124 = scmp.eq.s32.totalorder %s20, 0
    %p125 = por %p123, %p124
    %p126 = scmp.ne.s32.totalorder %s114, %s115
    %p127 = scmp.eq.s32.totalorder %s21, 1
    %p128 = por %p126, %p127
    %p130 = scmp.ne.s32.totalorder %s115, %s129
    %p131 = scmp.eq.s32.totalorder %s21, 0
    %p132 = por %p130, %p131
    %s134 = sadd.s32 %s133, 1
    %p137 = scmp.eq.s32.totalorder %s15, 1
    %p138 = scmp.ne.s32.totalorder %s133, %s135
    %p139 = scmp.eq.s32.totalorder %s15, 0
    %p140 = por %p138, %p139
    %p141 = scmp.ne.s32.totalorder %s133, %s135
    %p142 = scmp.eq.s32.totalorder %s20, 1
    %p143 = por %p141, %p142
    %p144 = scmp.ne.s32.totalorder %s135, %s136
    %p145 = scmp.eq.s32.totalorder %s20, 0
    %p146 = por %p144, %p145
    %p147 = scmp.ne.s32.totalorder %s135, %s136
    %p148 = scmp.eq.s32.totalorder %s21, 1
    %p149 = por %p147, %p148
    %p151 = scmp.ne.s32.totalorder %s136, %s150
    %p152 = scmp.eq.s32.totalorder %s21, 0
    %p153 = por %p151, %p152
    %s155 = sadd.s32 %s154, 1
    %p158 = scmp.eq.s32.totalorder %s15, 1
    %p159 = scmp.ne.s32.totalorder %s154, %s156
    %p160 = scmp.eq.s32.totalorder %s15, 0
    %p161 = por %p159, %p160
    %p162 = scmp.ne.s32.totalorder %s154, %s156
    %p163 = scmp.eq.s32.totalorder %s20, 1
    %p164 = por %p162, %p163
    %p165 = scmp.ne.s32.totalorder %s156, %s157
    %p166 = scmp.eq.s32.totalorder %s20, 0
    %p167 = por %p165, %p166
    %p168 = scmp.ne.s32.totalorder %s156, %s157
    %p169 = scmp.eq.s32.totalorder %s21, 1
    %p170 = por %p168, %p169
    %p172 = scmp.ne.s32.totalorder %s157, %s171
    %p173 = scmp.eq.s32.totalorder %s21, 0
    %p174 = por %p172, %p173
    %s176 = sadd.s32 %s175, 1
    %p179 = scmp.eq.s32.totalorder %s15, 1
    %p180 = scmp.ne.s32.totalorder %s175, %s177
    %p181 = scmp.eq.s32.totalorder %s15, 0
    %p182 = por %p180, %p181
    %p183 = scmp.ne.s32.totalorder %s175, %s177
    %p184 = scmp.eq.s32.totalorder %s20, 1
    %p185 = por %p183, %p184
    %p186 = scmp.ne.s32.totalorder %s177, %s178
    %p187 = scmp.eq.s32.totalorder %s20, 0
    %p188 = por %p186, %p187
    %p189 = scmp.ne.s32.totalorder %s177, %s178
    %p190 = scmp.eq.s32.totalorder %s21, 1
    %p191 = por %p189, %p190
    %p193 = scmp.ne.s32.totalorder %s178, %s192
    %p194 = scmp.eq.s32.totalorder %s21, 0
    %p195 = por %p193, %p194
    %s197 = sadd.s32 %s196, 1
    %p200 = scmp.eq.s32.totalorder %s15, 1
    %p201 = scmp.ne.s32.totalorder %s196, %s198
    %p202 = scmp.eq.s32.totalorder %s15, 0
    %p203 = por %p201, %p202
    %p204 = scmp.ne.s32.totalorder %s196, %s198
    %p205 = scmp.eq.s32.totalorder %s20, 1
    %p206 = por %p204, %p205
    %p207 = scmp.ne.s32.totalorder %s198, %s199
    %p208 = scmp.eq.s32.totalorder %s20, 0
    %p209 = por %p207, %p208
    %p210 = scmp.ne.s32.totalorder %s198, %s199
    %p211 = scmp.eq.s32.totalorder %s21, 1
    %p212 = por %p210, %p211
    %p214 = scmp.ne.s32.totalorder %s199, %s213
    %p215 = scmp.eq.s32.totalorder %s21, 0
    %p216 = por %p214, %p215
    %s217 = ssub.s32 %s15, %s22
    %p218 = scmp.eq.s32.totalorder %s217, 0
    %s220 = sadd.s32 %s219, 1
    %s221 = scalar_select %p218, %s219, %s220
    %p224 = pneg %p218
    %p225 = scmp.eq.s32.totalorder %s15, 1
    %p226 = por %p224, %p225
    %p227 = scmp.ne.s32.totalorder %s219, %s222
    %p228 = scmp.eq.s32.totalorder %s15, 0
    %p229 = por %p227, %p228
    %p230 = scmp.ne.s32.totalorder %s219, %s222
    %p231 = scmp.eq.s32.totalorder %s20, 1
    %p232 = por %p230, %p231
    %p233 = scmp.ne.s32.totalorder %s222, %s223
    %p234 = scmp.eq.s32.totalorder %s20, 0
    %p235 = por %p233, %p234
    %p236 = scmp.ne.s32.totalorder %s222, %s223
    %p237 = scmp.eq.s32.totalorder %s21, 1
    %p238 = por %p236, %p237
    %p240 = scmp.ne.s32.totalorder %s223, %s239
    %p241 = scmp.eq.s32.totalorder %s21, 0
    %p242 = por %p240, %p241
    %p243 = scmp.le.s32.totalorder 1, %s15
    %p244 = scmp.lt.s32.totalorder %s15, 3
    %p245 = pnand %p243, %p244
    %p246 = pneg %p245
    // Predicated region
    $region9: #{autoencoder_forward.1} parent=5 // pred_check
      _
    $region10: #{autoencoder_forward.1} parent=5 // pred_check_branch
      %248 = sbr.rel (%p245) target = $region12
    $region11: #{autoencoder_forward.1} parent=5 // pred_region
      %s249 = ssub.s32 %s15, 1
      // Predicated region
      $region13: #{autoencoder_forward.1} parent=11 // pred_check
        %p250 = pneg %p62
      $region14: #{autoencoder_forward.1} parent=11 // pred_check_branch
        %252 = sbr.rel (%p250) target = $region16
      $region15: #{autoencoder_forward.1} parent=11 // pred_region
        _
      $region16: #{autoencoder_forward.1} parent=11 // pred_fallthru
        _
      // Predicated region
      $region17: #{autoencoder_forward.1} parent=11 // pred_check
        %p253 = pneg %p83
      $region18: #{autoencoder_forward.1} parent=11 // pred_check_branch
        %255 = sbr.rel (%p253) target = $region20
      $region19: #{autoencoder_forward.1} parent=11 // pred_region
        _
      $region20: #{autoencoder_forward.1} parent=11 // pred_fallthru
        _
      // Predicated region
      $region21: #{autoencoder_forward.1} parent=11 // pred_check
        %p256 = pneg %p104
      $region22: #{autoencoder_forward.1} parent=11 // pred_check_branch
        %258 = sbr.rel (%p256) target = $region24
      $region23: #{autoencoder_forward.1} parent=11 // pred_region
        _
      $region24: #{autoencoder_forward.1} parent=11 // pred_fallthru
        _
      // Predicated region
      $region25: #{autoencoder_forward.1} parent=11 // pred_check
        %p259 = pneg %p125
      $region26: #{autoencoder_forward.1} parent=11 // pred_check_branch
        %261 = sbr.rel (%p259) target = $region28
      $region27: #{autoencoder_forward.1} parent=11 // pred_region
        _
      $region28: #{autoencoder_forward.1} parent=11 // pred_fallthru
        _
      // Predicated region
      $region29: #{autoencoder_forward.1} parent=11 // pred_check
        %p262 = pneg %p146
      $region30: #{autoencoder_forward.1} parent=11 // pred_check_branch
        %264 = sbr.rel (%p262) target = $region32
      $region31: #{autoencoder_forward.1} parent=11 // pred_region
        _
      $region32: #{autoencoder_forward.1} parent=11 // pred_fallthru
        _
      // Predicated region
      $region33: #{autoencoder_forward.1} parent=11 // pred_check
        %p265 = pneg %p167
      $region34: #{autoencoder_forward.1} parent=11 // pred_check_branch
        %267 = sbr.rel (%p265) target = $region36
      $region35: #{autoencoder_forward.1} parent=11 // pred_region
        _
      $region36: #{autoencoder_forward.1} parent=11 // pred_fallthru
        _
      // Predicated region
      $region37: #{autoencoder_forward.1} parent=11 // pred_check
        %p268 = pneg %p188
      $region38: #{autoencoder_forward.1} parent=11 // pred_check_branch
        %270 = sbr.rel (%p268) target = $region40
      $region39: #{autoencoder_forward.1} parent=11 // pred_region
        _
      $region40: #{autoencoder_forward.1} parent=11 // pred_fallthru
        _
      // Predicated region
      $region41: #{autoencoder_forward.1} parent=11 // pred_check
        %p271 = pneg %p209
      $region42: #{autoencoder_forward.1} parent=11 // pred_check_branch
        %273 = sbr.rel (%p271) target = $region44
      $region43: #{autoencoder_forward.1} parent=11 // pred_region
        _
      $region44: #{autoencoder_forward.1} parent=11 // pred_fallthru
        _
    $region12: #{autoencoder_forward.1} parent=5 // pred_fallthru
      _
    %p274 = scmp.lt.s32.totalorder %s15, 2
    // Predicated region
    $region45: #{autoencoder_forward.1} parent=5 // pred_check
      %p275 = pneg %p274
    $region46: #{autoencoder_forward.1} parent=5 // pred_check_branch
      %277 = sbr.rel (%p275) target = $region48
    $region47: #{autoencoder_forward.1} parent=5 // pred_region
      // Predicated region
      $region49: #{autoencoder_forward.1} parent=47 // pred_check
        %p278 = pneg %p35
      $region50: #{autoencoder_forward.1} parent=47 // pred_check_branch
        %280 = sbr.rel (%p278) target = $region52
      $region51: #{autoencoder_forward.1} parent=47 // pred_region
        %s281 = smul.u32 16, %s15
        %p282 = scmp.lt.s32.totalorder %s281, 31
        %s283 = scalar_select %p282, %s281, 31
        %s284 = smul.addr %s283, 8
        %s285 = scalar_lea.vmem %s0, %s284
        %s286 = smul.u32 16, %s15
      $region52: #{autoencoder_forward.1} parent=47 // pred_fallthru
        _
    $region48: #{autoencoder_forward.1} parent=5 // pred_fallthru
      _
    %p287 = scmp.le.s32.totalorder 1, %s15
    %p288 = scmp.lt.s32.totalorder %s15, 3
    %p289 = pnand %p287, %p288
    %p290 = pneg %p289
    // Predicated region
    $region53: #{autoencoder_forward.1} parent=5 // pred_check
      _
    $region54: #{autoencoder_forward.1} parent=5 // pred_check_branch
      %292 = sbr.rel (%p289) target = $region56
    $region55: #{autoencoder_forward.1} parent=5 // pred_region
      %s293 = ssub.s32 %s15, 1
      %s294 = smul.u32 16, %s20
      %p295 = scmp.lt.s32.totalorder %s294, 31
      %s296 = scalar_select %p295, %s294, 31
      %s297 = smul.addr %s296, 8
      %s298 = scalar_lea.vmem %s0, %s297
      %p299 = pneg %p41
      %p300 = pneg %p38
      %p301 = pneg %p62
      %p302 = pneg %p59
      %p303 = pneg %p83
      %p304 = pneg %p80
      %p305 = pneg %p104
      %p306 = pneg %p101
      %p307 = pneg %p125
      %p308 = pneg %p122
      %p309 = pneg %p146
      %p310 = pneg %p143
      %p311 = pneg %p167
      %p312 = pneg %p164
      %p313 = pneg %p188
      %p314 = pneg %p185
      %p315 = pneg %p209
      %p316 = pneg %p206
      %p317 = pneg %p235
      %p318 = pneg %p232
      %s319 = smul.u32 16, %s20
      %p320 = scmp.lt.s32.totalorder %s319, 31
      %s321 = scalar_select %p320, %s319, 31
      %s322 = smul.addr %s321, 8
      %s323 = scalar_lea.vmem %s9, %s322
      %s324 = smul.u32 16, %s20
      %p325 = scmp.lt.s32.totalorder %s324, 31
      %s326 = scalar_select %p325, %s324, 31
      %s327 = smul.addr %s326, 8
      %s328 = scalar_lea.vmem %s0, %s327
      %s329 = smul.u32 16, %s20
      %s330 = smul.u32 16, %s20
      %p331 = scmp.lt.s32.totalorder %s330, 31
      %s332 = scalar_select %p331, %s330, 31
      %s333 = smul.addr %s332, 8
      %s334 = scalar_lea.vmem %s9, %s333
      %s335 = smul.u32 16, %s20
      %v336 = vld [vmem:[%s2] sm:$0x1]
      %v337 = vld [vmem:[%s4] sm:$0x1]
      %v338 = vld [vmem:[%s6] sm:$0x1]
      %v339 = vld [vmem:[%s8] sm:$0x1]
      %v340 = vld [vmem:[%s328] sm:$0xff]
      %v341 = vld [vmem:[%s328 + $0x8] sm:$0xff]
      %v342 = vld [vmem:[%s328 + $0x10] sm:$0xff]
      %v343 = vld [vmem:[%s328 + $0x18] sm:$0xff]
      %v344 = vld [vmem:[%s328 + $0x20] sm:$0xff]
      %v345 = vld [vmem:[%s328 + $0x28] sm:$0xff]
      %v346 = vld [vmem:[%s328 + $0x30] sm:$0xff]
      %v347 = vld [vmem:[%s328 + $0x38] sm:$0xff]
      %v348 = vld [vmem:[%s328 + $0x40] sm:$0xff]
      %v349 = vld [vmem:[%s328 + $0x48] sm:$0xff]
      %v350 = vld [vmem:[%s328 + $0x50] sm:$0xff]
      %v351 = vld [vmem:[%s328 + $0x58] sm:$0xff]
      %v352 = vld [vmem:[%s328 + $0x60] sm:$0xff]
      %v353 = vld [vmem:[%s328 + $0x68] sm:$0xff]
      %v354 = vld [vmem:[%s328 + $0x70] sm:$0xff]
      %v355 = vld [vmem:[%s328 + $0x78] sm:$0xff]
      %v356 = vld [vmem:[%s1] sm:$0xff]
      %v357 = vld [vmem:[%s1 + $0x8] sm:$0xff]
      %v358 = vld [vmem:[%s1 + $0x10] sm:$0xff]
      %v359 = vld [vmem:[%s1 + $0x18] sm:$0xff]
      %v360 = vld [vmem:[%s1 + $0x20] sm:$0xff]
      %v361 = vld [vmem:[%s1 + $0x28] sm:$0xff]
      %v362 = vld [vmem:[%s1 + $0x30] sm:$0xff]
      %v363 = vld [vmem:[%s1 + $0x38] sm:$0xff]
      %v364 = vld [vmem:[%s1 + $0x40] sm:$0xff]
      %v365 = vld [vmem:[%s1 + $0x48] sm:$0xff]
      %v366 = vld [vmem:[%s1 + $0x50] sm:$0xff]
      %v367 = vld [vmem:[%s1 + $0x58] sm:$0xff]
      %v368 = vld [vmem:[%s1 + $0x60] sm:$0xff]
      %v369 = vld [vmem:[%s1 + $0x68] sm:$0xff]
      %v370 = vld [vmem:[%s1 + $0x70] sm:$0xff]
      %v371 = vld [vmem:[%s1 + $0x78] sm:$0xff]
      %v373 = vlaneseq
      %v374 = vshrl.u32 %v373, 7
      %v375 = vsub.s32 0, %v374
      %v376 = vrot.slane %v336, %v375
      %378 = vmatprep.subr.mxu0 0.0
      %379 = vmatpush1.msra.mxu0 %v356
      %380 = vmatprep.subr.mxu0 0.0
      %381 = vmatpush1.msra.mxu0 %v357
      %382 = vmatprep.subr.mxu0 0.0
      %383 = vmatpush1.msra.mxu0 %v358
      %384 = vmatprep.subr.mxu0 0.0
      %385 = vmatpush1.msra.mxu0 %v359
      %386 = vmatprep.subr.mxu0 0.0
      %387 = vmatpush1.msra.mxu0 %v360
      %388 = vmatprep.subr.mxu0 0.0
      %389 = vmatpush1.msra.mxu0 %v361
      %390 = vmatprep.subr.mxu0 0.0
      %391 = vmatpush1.msra.mxu0 %v362
      %392 = vmatprep.subr.mxu0 0.0
      %393 = vmatpush1.msra.mxu0 %v363
      %394 = vmatprep.subr.mxu0 0.0
      %395 = vmatpush1.msra.mxu0 %v364
      %396 = vmatprep.subr.mxu0 0.0
      %397 = vmatpush1.msra.mxu0 %v365
      %398 = vmatprep.subr.mxu0 0.0
      %399 = vmatpush1.msra.mxu0 %v366
      %400 = vmatprep.subr.mxu0 0.0
      %401 = vmatpush1.msra.mxu0 %v367
      %402 = vmatprep.subr.mxu0 0.0
      %403 = vmatpush1.msra.mxu0 %v368
      %404 = vmatprep.subr.mxu0 0.0
      %405 = vmatpush1.msra.mxu0 %v369
      %406 = vmatprep.subr.mxu0 0.0
      %407 = vmatpush1.msra.mxu0 %v370
      %408 = vmatprep.subr.mxu0 0.0
      %409 = vmatpush1.msra.mxu0 %v371
      %410 = vmatprep.subr.mxu0 0.0
      %411 = vmatpush1.msra.mxu0 0.0
      %412 = vmatprep.subr.mxu0 0.0
      %413 = vmatpush1.msra.mxu0 0.0
      %414 = vmatprep.subr.mxu0 0.0
      %415 = vmatpush1.msra.mxu0 0.0
      %416 = vmatprep.subr.mxu0 0.0
      %417 = vmatpush1.msra.mxu0 0.0
      %418 = vmatprep.subr.mxu0 0.0
      %419 = vmatpush1.msra.mxu0 0.0
      %420 = vmatprep.subr.mxu0 0.0
      %421 = vmatpush1.msra.mxu0 0.0
      %422 = vmatprep.subr.mxu0 0.0
      %423 = vmatpush1.msra.mxu0 0.0
      %424 = vmatprep.subr.mxu0 0.0
      %425 = vmatpush1.msra.mxu0 0.0
      %426 = vmatprep.subr.mxu0 0.0
      %427 = vmatpush1.msra.mxu0 0.0
      %428 = vmatprep.subr.mxu0 0.0
      %429 = vmatpush1.msra.mxu0 0.0
      %430 = vmatprep.subr.mxu0 0.0
      %431 = vmatpush1.msra.mxu0 0.0
      %432 = vmatprep.subr.mxu0 0.0
      %433 = vmatpush1.msra.mxu0 0.0
      %434 = vmatprep.subr.mxu0 0.0
      %435 = vmatpush1.msra.mxu0 0.0
      %436 = vmatprep.subr.mxu0 0.0
      %437 = vmatpush1.msra.mxu0 0.0
      %438 = vmatprep.subr.mxu0 0.0
      %439 = vmatpush1.msra.mxu0 0.0
      %440 = vmatprep.subr.mxu0 0.0
      %441 = vmatpush1.msra.mxu0 0.0
      %442 = vmatprep.mubr.f32.mxu0 0.0
      %443 = vmatmul.mubr.f32.gmra.mrb[0].mxu0 %v340
      %v444 = vpop.f32.mrb[0].mxu0
      %v445 = vadd.f32 %v376, %v444
      %v446 = vpop.f32.mrb[0].mxu0
      %447 = vmatprep.mubr.f32.mxu0 0.0
      %448 = vmatmul.mubr.f32.gmra.mrb[0].mxu0 %v341
      %v449 = vpop.f32.mrb[0].mxu0
      %v450 = vadd.f32 %v376, %v449
      %v451 = vpop.f32.mrb[0].mxu0
      %452 = vmatprep.mubr.f32.mxu0 0.0
      %453 = vmatmul.mubr.f32.gmra.mrb[0].mxu0 %v342
      %v454 = vpop.f32.mrb[0].mxu0
      %v455 = vadd.f32 %v376, %v454
      %v456 = vpop.f32.mrb[0].mxu0
      %457 = vmatprep.mubr.f32.mxu0 0.0
      %458 = vmatmul.mubr.f32.gmra.mrb[0].mxu0 %v343
      %v459 = vpop.f32.mrb[0].mxu0
      %v460 = vadd.f32 %v376, %v459
      %v461 = vpop.f32.mrb[0].mxu0
      %462 = vmatprep.mubr.f32.mxu0 0.0
      %463 = vmatmul.mubr.f32.gmra.mrb[0].mxu0 %v344
      %v464 = vpop.f32.mrb[0].mxu0
      %v465 = vadd.f32 %v376, %v464
      %v466 = vpop.f32.mrb[0].mxu0
      %467 = vmatprep.mubr.f32.mxu0 0.0
      %468 = vmatmul.mubr.f32.gmra.mrb[0].mxu0 %v345
      %v469 = vpop.f32.mrb[0].mxu0
      %v470 = vadd.f32 %v376, %v469
      %v471 = vpop.f32.mrb[0].mxu0
      %472 = vmatprep.mubr.f32.mxu0 0.0
      %473 = vmatmul.mubr.f32.gmra.mrb[0].mxu0 %v346
      %v474 = vpop.f32.mrb[0].mxu0
      %v475 = vadd.f32 %v376, %v474
      %v476 = vpop.f32.mrb[0].mxu0
      %477 = vmatprep.mubr.f32.mxu0 0.0
      %478 = vmatmul.mubr.f32.gmra.mrb[0].mxu0 %v347
      %v479 = vpop.f32.mrb[0].mxu0
      %v480 = vadd.f32 %v376, %v479
      %v481 = vpop.f32.mrb[0].mxu0
      %482 = vmatprep.mubr.f32.mxu0 0.0
      %483 = vmatmul.mubr.f32.gmra.mrb[0].mxu0 %v348
      %v484 = vpop.f32.mrb[0].mxu0
      %v485 = vadd.f32 %v376, %v484
      %v486 = vpop.f32.mrb[0].mxu0
      %487 = vmatprep.mubr.f32.mxu0 0.0
      %488 = vmatmul.mubr.f32.gmra.mrb[0].mxu0 %v349
      %v489 = vpop.f32.mrb[0].mxu0
      %v490 = vadd.f32 %v376, %v489
      %v491 = vpop.f32.mrb[0].mxu0
      %492 = vmatprep.mubr.f32.mxu0 0.0
      %493 = vmatmul.mubr.f32.gmra.mrb[0].mxu0 %v350
      %v494 = vpop.f32.mrb[0].mxu0
      %v495 = vadd.f32 %v376, %v494
      %v496 = vpop.f32.mrb[0].mxu0
      %497 = vmatprep.mubr.f32.mxu0 0.0
      %498 = vmatmul.mubr.f32.gmra.mrb[0].mxu0 %v351
      %v499 = vpop.f32.mrb[0].mxu0
      %v500 = vadd.f32 %v376, %v499
      %v501 = vpop.f32.mrb[0].mxu0
      %502 = vmatprep.mubr.f32.mxu0 0.0
      %503 = vmatmul.mubr.f32.gmra.mrb[0].mxu0 %v352
      %v504 = vpop.f32.mrb[0].mxu0
      %v505 = vadd.f32 %v376, %v504
      %v506 = vpop.f32.mrb[0].mxu0
      %507 = vmatprep.mubr.f32.mxu0 0.0
      %508 = vmatmul.mubr.f32.gmra.mrb[0].mxu0 %v353
      %v509 = vpop.f32.mrb[0].mxu0
      %v510 = vadd.f32 %v376, %v509
      %v511 = vpop.f32.mrb[0].mxu0
      %512 = vmatprep.mubr.f32.mxu0 0.0
      %513 = vmatmul.mubr.f32.gmra.mrb[0].mxu0 %v354
      %v514 = vpop.f32.mrb[0].mxu0
      %v515 = vadd.f32 %v376, %v514
      %v516 = vpop.f32.mrb[0].mxu0
      %517 = vmatprep.mubr.f32.mxu0 0.0
      %518 = vmatmul.mubr.f32.gmra.mrb[0].mxu0 %v355
      %v519 = vpop.f32.mrb[0].mxu0
      %v520 = vadd.f32 %v376, %v519
      %v521 = vpop.f32.mrb[0].mxu0
      %522 = vdwg.mxu0
      %v523 = vmax.f32 %v445, 0.0
      %v524 = vmax.f32 %v450, 0.0
      %v525 = vmax.f32 %v455, 0.0
      %v526 = vmax.f32 %v460, 0.0
      %v527 = vmax.f32 %v465, 0.0
      %v528 = vmax.f32 %v470, 0.0
      %v529 = vmax.f32 %v475, 0.0
      %v530 = vmax.f32 %v480, 0.0
      %v531 = vmax.f32 %v485, 0.0
      %v532 = vmax.f32 %v490, 0.0
      %v533 = vmax.f32 %v495, 0.0
      %v534 = vmax.f32 %v500, 0.0
      %v535 = vmax.f32 %v505, 0.0
      %v536 = vmax.f32 %v510, 0.0
      %v537 = vmax.f32 %v515, 0.0
      %v538 = vmax.f32 %v520, 0.0
      %v539 = vld [vmem:[%s3] sm:$0xff]
      %v540 = vld [vmem:[%s3 + $0x8] sm:$0xff]
      %v541 = vld [vmem:[%s3 + $0x10] sm:$0xff]
      %v542 = vld [vmem:[%s3 + $0x18] sm:$0xff]
      %v543 = vld [vmem:[%s3 + $0x20] sm:$0xff]
      %v544 = vld [vmem:[%s3 + $0x28] sm:$0xff]
      %v545 = vld [vmem:[%s3 + $0x30] sm:$0xff]
      %v546 = vld [vmem:[%s3 + $0x38] sm:$0xff]
      %v547 = vld [vmem:[%s3 + $0x40] sm:$0xff]
      %v548 = vld [vmem:[%s3 + $0x48] sm:$0xff]
      %v549 = vld [vmem:[%s3 + $0x50] sm:$0xff]
      %v550 = vld [vmem:[%s3 + $0x58] sm:$0xff]
      %v551 = vld [vmem:[%s3 + $0x60] sm:$0xff]
      %v552 = vld [vmem:[%s3 + $0x68] sm:$0xff]
      %v553 = vld [vmem:[%s3 + $0x70] sm:$0xff]
      %v554 = vld [vmem:[%s3 + $0x78] sm:$0xff]
      %v556 = vlaneseq
      %v557 = vshrl.u32 %v556, 7
      %v558 = vsub.s32 0, %v557
      %v559 = vrot.slane %v337, %v558
      %561 = vmatprep.subr.mxu0 0.0
      %562 = vmatpush1.msra.mxu0 %v539
      %563 = vmatprep.subr.mxu0 0.0
      %564 = vmatpush1.msra.mxu0 %v540
      %565 = vmatprep.subr.mxu0 0.0
      %566 = vmatpush1.msra.mxu0 %v541
      %567 = vmatprep.subr.mxu0 0.0
      %568 = vmatpush1.msra.mxu0 %v542
      %569 = vmatprep.subr.mxu0 0.0
      %570 = vmatpush1.msra.mxu0 %v543
      %571 = vmatprep.subr.mxu0 0.0
      %572 = vmatpush1.msra.mxu0 %v544
      %573 = vmatprep.subr.mxu0 0.0
      %574 = vmatpush1.msra.mxu0 %v545
      %575 = vmatprep.subr.mxu0 0.0
      %576 = vmatpush1.msra.mxu0 %v546
      %577 = vmatprep.subr.mxu0 0.0
      %578 = vmatpush1.msra.mxu0 %v547
      %579 = vmatprep.subr.mxu0 0.0
      %580 = vmatpush1.msra.mxu0 %v548
      %581 = vmatprep.subr.mxu0 0.0
      %582 = vmatpush1.msra.mxu0 %v549
      %583 = vmatprep.subr.mxu0 0.0
      %584 = vmatpush1.msra.mxu0 %v550
      %585 = vmatprep.subr.mxu0 0.0
      %586 = vmatpush1.msra.mxu0 %v551
      %587 = vmatprep.subr.mxu0 0.0
      %588 = vmatpush1.msra.mxu0 %v552
      %589 = vmatprep.subr.mxu0 0.0
      %590 = vmatpush1.msra.mxu0 %v553
      %591 = vmatprep.subr.mxu0 0.0
      %592 = vmatpush1.msra.mxu0 %v554
      %593 = vmatprep.subr.mxu0 0.0
      %594 = vmatpush1.msra.mxu0 0.0
      %595 = vmatprep.subr.mxu0 0.0
      %596 = vmatpush1.msra.mxu0 0.0
      %597 = vmatprep.subr.mxu0 0.0
      %598 = vmatpush1.msra.mxu0 0.0
      %599 = vmatprep.subr.mxu0 0.0
      %600 = vmatpush1.msra.mxu0 0.0
      %601 = vmatprep.subr.mxu0 0.0
      %602 = vmatpush1.msra.mxu0 0.0
      %603 = vmatprep.subr.mxu0 0.0
      %604 = vmatpush1.msra.mxu0 0.0
      %605 = vmatprep.subr.mxu0 0.0
      %606 = vmatpush1.msra.mxu0 0.0
      %607 = vmatprep.subr.mxu0 0.0
      %608 = vmatpush1.msra.mxu0 0.0
      %609 = vmatprep.subr.mxu0 0.0
      %610 = vmatpush1.msra.mxu0 0.0
      %611 = vmatprep.subr.mxu0 0.0
      %612 = vmatpush1.msra.mxu0 0.0
      %613 = vmatprep.subr.mxu0 0.0
      %614 = vmatpush1.msra.mxu0 0.0
      %615 = vmatprep.subr.mxu0 0.0
      %616 = vmatpush1.msra.mxu0 0.0
      %617 = vmatprep.subr.mxu0 0.0
      %618 = vmatpush1.msra.mxu0 0.0
      %619 = vmatprep.subr.mxu0 0.0
      %620 = vmatpush1.msra.mxu0 0.0
      %621 = vmatprep.subr.mxu0 0.0
      %622 = vmatpush1.msra.mxu0 0.0
      %623 = vmatprep.subr.mxu0 0.0
      %624 = vmatpush1.msra.mxu0 0.0
      %625 = vmatprep.mubr.f32.mxu0 0.0
      %626 = vmatmul.mubr.f32.gmra.mrb[0].mxu0 %v523
      %v627 = vpop.f32.mrb[0].mxu0
      %v628 = vadd.f32 %v559, %v627
      %v629 = vpop.f32.mrb[0].mxu0
      %630 = vmatprep.mubr.f32.mxu0 0.0
      %631 = vmatmul.mubr.f32.gmra.mrb[0].mxu0 %v524
      %v632 = vpop.f32.mrb[0].mxu0
      %v633 = vadd.f32 %v559, %v632
      %v634 = vpop.f32.mrb[0].mxu0
      %635 = vmatprep.mubr.f32.mxu0 0.0
      %636 = vmatmul.mubr.f32.gmra.mrb[0].mxu0 %v525
      %v637 = vpop.f32.mrb[0].mxu0
      %v638 = vadd.f32 %v559, %v637
      %v639 = vpop.f32.mrb[0].mxu0
      %640 = vmatprep.mubr.f32.mxu0 0.0
      %641 = vmatmul.mubr.f32.gmra.mrb[0].mxu0 %v526
      %v642 = vpop.f32.mrb[0].mxu0
      %v643 = vadd.f32 %v559, %v642
      %v644 = vpop.f32.mrb[0].mxu0
      %645 = vmatprep.mubr.f32.mxu0 0.0
      %646 = vmatmul.mubr.f32.gmra.mrb[0].mxu0 %v527
      %v647 = vpop.f32.mrb[0].mxu0
      %v648 = vadd.f32 %v559, %v647
      %v649 = vpop.f32.mrb[0].mxu0
      %650 = vmatprep.mubr.f32.mxu0 0.0
      %651 = vmatmul.mubr.f32.gmra.mrb[0].mxu0 %v528
      %v652 = vpop.f32.mrb[0].mxu0
      %v653 = vadd.f32 %v559, %v652
      %v654 = vpop.f32.mrb[0].mxu0
      %655 = vmatprep.mubr.f32.mxu0 0.0
      %656 = vmatmul.mubr.f32.gmra.mrb[0].mxu0 %v529
      %v657 = vpop.f32.mrb[0].mxu0
      %v658 = vadd.f32 %v559, %v657
      %v659 = vpop.f32.mrb[0].mxu0
      %660 = vmatprep.mubr.f32.mxu0 0.0
      %661 = vmatmul.mubr.f32.gmra.mrb[0].mxu0 %v530
      %v662 = vpop.f32.mrb[0].mxu0
      %v663 = vadd.f32 %v559, %v662
      %v664 = vpop.f32.mrb[0].mxu0
      %665 = vmatprep.mubr.f32.mxu0 0.0
      %666 = vmatmul.mubr.f32.gmra.mrb[0].mxu0 %v531
      %v667 = vpop.f32.mrb[0].mxu0
      %v668 = vadd.f32 %v559, %v667
      %v669 = vpop.f32.mrb[0].mxu0
      %670 = vmatprep.mubr.f32.mxu0 0.0
      %671 = vmatmul.mubr.f32.gmra.mrb[0].mxu0 %v532
      %v672 = vpop.f32.mrb[0].mxu0
      %v673 = vadd.f32 %v559, %v672
      %v674 = vpop.f32.mrb[0].mxu0
      %675 = vmatprep.mubr.f32.mxu0 0.0
      %676 = vmatmul.mubr.f32.gmra.mrb[0].mxu0 %v533
      %v677 = vpop.f32.mrb[0].mxu0
      %v678 = vadd.f32 %v559, %v677
      %v679 = vpop.f32.mrb[0].mxu0
      %680 = vmatprep.mubr.f32.mxu0 0.0
      %681 = vmatmul.mubr.f32.gmra.mrb[0].mxu0 %v534
      %v682 = vpop.f32.mrb[0].mxu0
      %v683 = vadd.f32 %v559, %v682
      %v684 = vpop.f32.mrb[0].mxu0
      %685 = vmatprep.mubr.f32.mxu0 0.0
      %686 = vmatmul.mubr.f32.gmra.mrb[0].mxu0 %v535
      %v687 = vpop.f32.mrb[0].mxu0
      %v688 = vadd.f32 %v559, %v687
      %v689 = vpop.f32.mrb[0].mxu0
      %690 = vmatprep.mubr.f32.mxu0 0.0
      %691 = vmatmul.mubr.f32.gmra.mrb[0].mxu0 %v536
      %v692 = vpop.f32.mrb[0].mxu0
      %v693 = vadd.f32 %v559, %v692
      %v694 = vpop.f32.mrb[0].mxu0
      %695 = vmatprep.mubr.f32.mxu0 0.0
      %696 = vmatmul.mubr.f32.gmra.mrb[0].mxu0 %v537
      %v697 = vpop.f32.mrb[0].mxu0
      %v698 = vadd.f32 %v559, %v697
      %v699 = vpop.f32.mrb[0].mxu0
      %700 = vmatprep.mubr.f32.mxu0 0.0
      %701 = vmatmul.mubr.f32.gmra.mrb[0].mxu0 %v538
      %v702 = vpop.f32.mrb[0].mxu0
      %v703 = vadd.f32 %v559, %v702
      %v704 = vpop.f32.mrb[0].mxu0
      %705 = vdwg.mxu0
      %v706 = vmax.f32 %v628, 0.0
      %v707 = vmax.f32 %v633, 0.0
      %v708 = vmax.f32 %v638, 0.0
      %v709 = vmax.f32 %v643, 0.0
      %v710 = vmax.f32 %v648, 0.0
      %v711 = vmax.f32 %v653, 0.0
      %v712 = vmax.f32 %v658, 0.0
      %v713 = vmax.f32 %v663, 0.0
      %v714 = vmax.f32 %v668, 0.0
      %v715 = vmax.f32 %v673, 0.0
      %v716 = vmax.f32 %v678, 0.0
      %v717 = vmax.f32 %v683, 0.0
      %v718 = vmax.f32 %v688, 0.0
      %v719 = vmax.f32 %v693, 0.0
      %v720 = vmax.f32 %v698, 0.0
      %v721 = vmax.f32 %v703, 0.0
      %v722 = vld [vmem:[%s5] sm:$0xff]
      %v723 = vld [vmem:[%s5 + $0x8] sm:$0xff]
      %v724 = vld [vmem:[%s5 + $0x10] sm:$0xff]
      %v725 = vld [vmem:[%s5 + $0x18] sm:$0xff]
      %v726 = vld [vmem:[%s5 + $0x20] sm:$0xff]
      %v727 = vld [vmem:[%s5 + $0x28] sm:$0xff]
      %v728 = vld [vmem:[%s5 + $0x30] sm:$0xff]
      %v729 = vld [vmem:[%s5 + $0x38] sm:$0xff]
      %v730 = vld [vmem:[%s5 + $0x40] sm:$0xff]
      %v731 = vld [vmem:[%s5 + $0x48] sm:$0xff]
      %v732 = vld [vmem:[%s5 + $0x50] sm:$0xff]
      %v733 = vld [vmem:[%s5 + $0x58] sm:$0xff]
      %v734 = vld [vmem:[%s5 + $0x60] sm:$0xff]
      %v735 = vld [vmem:[%s5 + $0x68] sm:$0xff]
      %v736 = vld [vmem:[%s5 + $0x70] sm:$0xff]
      %v737 = vld [vmem:[%s5 + $0x78] sm:$0xff]
      %v739 = vlaneseq
      %v740 = vshrl.u32 %v739, 7
      %v741 = vsub.s32 0, %v740
      %v742 = vrot.slane %v338, %v741
      %744 = vmatprep.subr.mxu0 0.0
      %745 = vmatpush1.msra.mxu0 %v722
      %746 = vmatprep.subr.mxu0 0.0
      %747 = vmatpush1.msra.mxu0 %v723
      %748 = vmatprep.subr.mxu0 0.0
      %749 = vmatpush1.msra.mxu0 %v724
      %750 = vmatprep.subr.mxu0 0.0
      %751 = vmatpush1.msra.mxu0 %v725
      %752 = vmatprep.subr.mxu0 0.0
      %753 = vmatpush1.msra.mxu0 %v726
      %754 = vmatprep.subr.mxu0 0.0
      %755 = vmatpush1.msra.mxu0 %v727
      %756 = vmatprep.subr.mxu0 0.0
      %757 = vmatpush1.msra.mxu0 %v728
      %758 = vmatprep.subr.mxu0 0.0
      %759 = vmatpush1.msra.mxu0 %v729
      %760 = vmatprep.subr.mxu0 0.0
      %761 = vmatpush1.msra.mxu0 %v730
      %762 = vmatprep.subr.mxu0 0.0
      %763 = vmatpush1.msra.mxu0 %v731
      %764 = vmatprep.subr.mxu0 0.0
      %765 = vmatpush1.msra.mxu0 %v732
      %766 = vmatprep.subr.mxu0 0.0
      %767 = vmatpush1.msra.mxu0 %v733
      %768 = vmatprep.subr.mxu0 0.0
      %769 = vmatpush1.msra.mxu0 %v734
      %770 = vmatprep.subr.mxu0 0.0
      %771 = vmatpush1.msra.mxu0 %v735
      %772 = vmatprep.subr.mxu0 0.0
      %773 = vmatpush1.msra.mxu0 %v736
      %774 = vmatprep.subr.mxu0 0.0
      %775 = vmatpush1.msra.mxu0 %v737
      %776 = vmatprep.subr.mxu0 0.0
      %777 = vmatpush1.msra.mxu0 0.0
      %778 = vmatprep.subr.mxu0 0.0
      %779 = vmatpush1.msra.mxu0 0.0
      %780 = vmatprep.subr.mxu0 0.0
      %781 = vmatpush1.msra.mxu0 0.0
      %782 = vmatprep.subr.mxu0 0.0
      %783 = vmatpush1.msra.mxu0 0.0
      %784 = vmatprep.subr.mxu0 0.0
      %785 = vmatpush1.msra.mxu0 0.0
      %786 = vmatprep.subr.mxu0 0.0
      %787 = vmatpush1.msra.mxu0 0.0
      %788 = vmatprep.subr.mxu0 0.0
      %789 = vmatpush1.msra.mxu0 0.0
      %790 = vmatprep.subr.mxu0 0.0
      %791 = vmatpush1.msra.mxu0 0.0
      %792 = vmatprep.subr.mxu0 0.0
      %793 = vmatpush1.msra.mxu0 0.0
      %794 = vmatprep.subr.mxu0 0.0
      %795 = vmatpush1.msra.mxu0 0.0
      %796 = vmatprep.subr.mxu0 0.0
      %797 = vmatpush1.msra.mxu0 0.0
      %798 = vmatprep.subr.mxu0 0.0
      %799 = vmatpush1.msra.mxu0 0.0
      %800 = vmatprep.subr.mxu0 0.0
      %801 = vmatpush1.msra.mxu0 0.0
      %802 = vmatprep.subr.mxu0 0.0
      %803 = vmatpush1.msra.mxu0 0.0
      %804 = vmatprep.subr.mxu0 0.0
      %805 = vmatpush1.msra.mxu0 0.0
      %806 = vmatprep.subr.mxu0 0.0
      %807 = vmatpush1.msra.mxu0 0.0
      %808 = vmatprep.mubr.f32.mxu0 0.0
      %809 = vmatmul.mubr.f32.gmra.mrb[0].mxu0 %v706
      %v810 = vpop.f32.mrb[0].mxu0
      %v811 = vadd.f32 %v742, %v810
      %v812 = vpop.f32.mrb[0].mxu0
      %813 = vmatprep.mubr.f32.mxu0 0.0
      %814 = vmatmul.mubr.f32.gmra.mrb[0].mxu0 %v707
      %v815 = vpop.f32.mrb[0].mxu0
      %v816 = vadd.f32 %v742, %v815
      %v817 = vpop.f32.mrb[0].mxu0
      %818 = vmatprep.mubr.f32.mxu0 0.0
      %819 = vmatmul.mubr.f32.gmra.mrb[0].mxu0 %v708
      %v820 = vpop.f32.mrb[0].mxu0
      %v821 = vadd.f32 %v742, %v820
      %v822 = vpop.f32.mrb[0].mxu0
      %823 = vmatprep.mubr.f32.mxu0 0.0
      %824 = vmatmul.mubr.f32.gmra.mrb[0].mxu0 %v709
      %v825 = vpop.f32.mrb[0].mxu0
      %v826 = vadd.f32 %v742, %v825
      %v827 = vpop.f32.mrb[0].mxu0
      %828 = vmatprep.mubr.f32.mxu0 0.0
      %829 = vmatmul.mubr.f32.gmra.mrb[0].mxu0 %v710
      %v830 = vpop.f32.mrb[0].mxu0
      %v831 = vadd.f32 %v742, %v830
      %v832 = vpop.f32.mrb[0].mxu0
      %833 = vmatprep.mubr.f32.mxu0 0.0
      %834 = vmatmul.mubr.f32.gmra.mrb[0].mxu0 %v711
      %v835 = vpop.f32.mrb[0].mxu0
      %v836 = vadd.f32 %v742, %v835
      %v837 = vpop.f32.mrb[0].mxu0
      %838 = vmatprep.mubr.f32.mxu0 0.0
      %839 = vmatmul.mubr.f32.gmra.mrb[0].mxu0 %v712
      %v840 = vpop.f32.mrb[0].mxu0
      %v841 = vadd.f32 %v742, %v840
      %v842 = vpop.f32.mrb[0].mxu0
      %843 = vmatprep.mubr.f32.mxu0 0.0
      %844 = vmatmul.mubr.f32.gmra.mrb[0].mxu0 %v713
      %v845 = vpop.f32.mrb[0].mxu0
      %v846 = vadd.f32 %v742, %v845
      %v847 = vpop.f32.mrb[0].mxu0
      %848 = vmatprep.mubr.f32.mxu0 0.0
      %849 = vmatmul.mubr.f32.gmra.mrb[0].mxu0 %v714
      %v850 = vpop.f32.mrb[0].mxu0
      %v851 = vadd.f32 %v742, %v850
      %v852 = vpop.f32.mrb[0].mxu0
      %853 = vmatprep.mubr.f32.mxu0 0.0
      %854 = vmatmul.mubr.f32.gmra.mrb[0].mxu0 %v715
      %v855 = vpop.f32.mrb[0].mxu0
      %v856 = vadd.f32 %v742, %v855
      %v857 = vpop.f32.mrb[0].mxu0
      %858 = vmatprep.mubr.f32.mxu0 0.0
      %859 = vmatmul.mubr.f32.gmra.mrb[0].mxu0 %v716
      %v860 = vpop.f32.mrb[0].mxu0
      %v861 = vadd.f32 %v742, %v860
      %v862 = vpop.f32.mrb[0].mxu0
      %863 = vmatprep.mubr.f32.mxu0 0.0
      %864 = vmatmul.mubr.f32.gmra.mrb[0].mxu0 %v717
      %v865 = vpop.f32.mrb[0].mxu0
      %v866 = vadd.f32 %v742, %v865
      %v867 = vpop.f32.mrb[0].mxu0
      %868 = vmatprep.mubr.f32.mxu0 0.0
      %869 = vmatmul.mubr.f32.gmra.mrb[0].mxu0 %v718
      %v870 = vpop.f32.mrb[0].mxu0
      %v871 = vadd.f32 %v742, %v870
      %v872 = vpop.f32.mrb[0].mxu0
      %873 = vmatprep.mubr.f32.mxu0 0.0
      %874 = vmatmul.mubr.f32.gmra.mrb[0].mxu0 %v719
      %v875 = vpop.f32.mrb[0].mxu0
      %v876 = vadd.f32 %v742, %v875
      %v877 = vpop.f32.mrb[0].mxu0
      %878 = vmatprep.mubr.f32.mxu0 0.0
      %879 = vmatmul.mubr.f32.gmra.mrb[0].mxu0 %v720
      %v880 = vpop.f32.mrb[0].mxu0
      %v881 = vadd.f32 %v742, %v880
      %v882 = vpop.f32.mrb[0].mxu0
      %883 = vmatprep.mubr.f32.mxu0 0.0
      %884 = vmatmul.mubr.f32.gmra.mrb[0].mxu0 %v721
      %v885 = vpop.f32.mrb[0].mxu0
      %v886 = vadd.f32 %v742, %v885
      %v887 = vpop.f32.mrb[0].mxu0
      %888 = vdwg.mxu0
      %v889 = vmax.f32 %v811, 0.0
      %v890 = vmax.f32 %v816, 0.0
      %v891 = vmax.f32 %v821, 0.0
      %v892 = vmax.f32 %v826, 0.0
      %v893 = vmax.f32 %v831, 0.0
      %v894 = vmax.f32 %v836, 0.0
      %v895 = vmax.f32 %v841, 0.0
      %v896 = vmax.f32 %v846, 0.0
      %v897 = vmax.f32 %v851, 0.0
      %v898 = vmax.f32 %v856, 0.0
      %v899 = vmax.f32 %v861, 0.0
      %v900 = vmax.f32 %v866, 0.0
      %v901 = vmax.f32 %v871, 0.0
      %v902 = vmax.f32 %v876, 0.0
      %v903 = vmax.f32 %v881, 0.0
      %v904 = vmax.f32 %v886, 0.0
      %v905 = vld [vmem:[%s7] sm:$0xff]
      %v906 = vld [vmem:[%s7 + $0x8] sm:$0xff]
      %v907 = vld [vmem:[%s7 + $0x10] sm:$0xff]
      %v908 = vld [vmem:[%s7 + $0x18] sm:$0xff]
      %v909 = vld [vmem:[%s7 + $0x20] sm:$0xff]
      %v910 = vld [vmem:[%s7 + $0x28] sm:$0xff]
      %v911 = vld [vmem:[%s7 + $0x30] sm:$0xff]
      %v912 = vld [vmem:[%s7 + $0x38] sm:$0xff]
      %v913 = vld [vmem:[%s7 + $0x40] sm:$0xff]
      %v914 = vld [vmem:[%s7 + $0x48] sm:$0xff]
      %v915 = vld [vmem:[%s7 + $0x50] sm:$0xff]
      %v916 = vld [vmem:[%s7 + $0x58] sm:$0xff]
      %v917 = vld [vmem:[%s7 + $0x60] sm:$0xff]
      %v918 = vld [vmem:[%s7 + $0x68] sm:$0xff]
      %v919 = vld [vmem:[%s7 + $0x70] sm:$0xff]
      %v920 = vld [vmem:[%s7 + $0x78] sm:$0xff]
      %v922 = vlaneseq
      %v923 = vshrl.u32 %v922, 7
      %v924 = vsub.s32 0, %v923
      %v925 = vrot.slane %v339, %v924
      %927 = vmatprep.subr.mxu0 0.0
      %928 = vmatpush1.msra.mxu0 %v905
      %929 = vmatprep.subr.mxu0 0.0
      %930 = vmatpush1.msra.mxu0 %v906
      %931 = vmatprep.subr.mxu0 0.0
      %932 = vmatpush1.msra.mxu0 %v907
      %933 = vmatprep.subr.mxu0 0.0
      %934 = vmatpush1.msra.mxu0 %v908
      %935 = vmatprep.subr.mxu0 0.0
      %936 = vmatpush1.msra.mxu0 %v909
      %937 = vmatprep.subr.mxu0 0.0
      %938 = vmatpush1.msra.mxu0 %v910
      %939 = vmatprep.subr.mxu0 0.0
      %940 = vmatpush1.msra.mxu0 %v911
      %941 = vmatprep.subr.mxu0 0.0
      %942 = vmatpush1.msra.mxu0 %v912
      %943 = vmatprep.subr.mxu0 0.0
      %944 = vmatpush1.msra.mxu0 %v913
      %945 = vmatprep.subr.mxu0 0.0
      %946 = vmatpush1.msra.mxu0 %v914
      %947 = vmatprep.subr.mxu0 0.0
      %948 = vmatpush1.msra.mxu0 %v915
      %949 = vmatprep.subr.mxu0 0.0
      %950 = vmatpush1.msra.mxu0 %v916
      %951 = vmatprep.subr.mxu0 0.0
      %952 = vmatpush1.msra.mxu0 %v917
      %953 = vmatprep.subr.mxu0 0.0
      %954 = vmatpush1.msra.mxu0 %v918
      %955 = vmatprep.subr.mxu0 0.0
      %956 = vmatpush1.msra.mxu0 %v919
      %957 = vmatprep.subr.mxu0 0.0
      %958 = vmatpush1.msra.mxu0 %v920
      %959 = vmatprep.subr.mxu0 0.0
      %960 = vmatpush1.msra.mxu0 0.0
      %961 = vmatprep.subr.mxu0 0.0
      %962 = vmatpush1.msra.mxu0 0.0
      %963 = vmatprep.subr.mxu0 0.0
      %964 = vmatpush1.msra.mxu0 0.0
      %965 = vmatprep.subr.mxu0 0.0
      %966 = vmatpush1.msra.mxu0 0.0
      %967 = vmatprep.subr.mxu0 0.0
      %968 = vmatpush1.msra.mxu0 0.0
      %969 = vmatprep.subr.mxu0 0.0
      %970 = vmatpush1.msra.mxu0 0.0
      %971 = vmatprep.subr.mxu0 0.0
      %972 = vmatpush1.msra.mxu0 0.0
      %973 = vmatprep.subr.mxu0 0.0
      %974 = vmatpush1.msra.mxu0 0.0
      %975 = vmatprep.subr.mxu0 0.0
      %976 = vmatpush1.msra.mxu0 0.0
      %977 = vmatprep.subr.mxu0 0.0
      %978 = vmatpush1.msra.mxu0 0.0
      %979 = vmatprep.subr.mxu0 0.0
      %980 = vmatpush1.msra.mxu0 0.0
      %981 = vmatprep.subr.mxu0 0.0
      %982 = vmatpush1.msra.mxu0 0.0
      %983 = vmatprep.subr.mxu0 0.0
      %984 = vmatpush1.msra.mxu0 0.0
      %985 = vmatprep.subr.mxu0 0.0
      %986 = vmatpush1.msra.mxu0 0.0
      %987 = vmatprep.subr.mxu0 0.0
      %988 = vmatpush1.msra.mxu0 0.0
      %989 = vmatprep.subr.mxu0 0.0
      %990 = vmatpush1.msra.mxu0 0.0
      %991 = vmatprep.mubr.f32.mxu0 0.0
      %992 = vmatmul.mubr.f32.gmra.mrb[0].mxu0 %v889
      %v993 = vpop.f32.mrb[0].mxu0
      %v994 = vadd.f32 %v925, %v993
      %v995 = vpop.f32.mrb[0].mxu0
      %996 = vmatprep.mubr.f32.mxu0 0.0
      %997 = vmatmul.mubr.f32.gmra.mrb[0].mxu0 %v890
      %v998 = vpop.f32.mrb[0].mxu0
      %v999 = vadd.f32 %v925, %v998
      %v1000 = vpop.f32.mrb[0].mxu0
      %1001 = vmatprep.mubr.f32.mxu0 0.0
      %1002 = vmatmul.mubr.f32.gmra.mrb[0].mxu0 %v891
      %v1003 = vpop.f32.mrb[0].mxu0
      %v1004 = vadd.f32 %v925, %v1003
      %v1005 = vpop.f32.mrb[0].mxu0
      %1006 = vmatprep.mubr.f32.mxu0 0.0
      %1007 = vmatmul.mubr.f32.gmra.mrb[0].mxu0 %v892
      %v1008 = vpop.f32.mrb[0].mxu0
      %v1009 = vadd.f32 %v925, %v1008
      %v1010 = vpop.f32.mrb[0].mxu0
      %1011 = vmatprep.mubr.f32.mxu0 0.0
      %1012 = vmatmul.mubr.f32.gmra.mrb[0].mxu0 %v893
      %v1013 = vpop.f32.mrb[0].mxu0
      %v1014 = vadd.f32 %v925, %v1013
      %v1015 = vpop.f32.mrb[0].mxu0
      %1016 = vmatprep.mubr.f32.mxu0 0.0
      %1017 = vmatmul.mubr.f32.gmra.mrb[0].mxu0 %v894
      %v1018 = vpop.f32.mrb[0].mxu0
      %v1019 = vadd.f32 %v925, %v1018
      %v1020 = vpop.f32.mrb[0].mxu0
      %1021 = vmatprep.mubr.f32.mxu0 0.0
      %1022 = vmatmul.mubr.f32.gmra.mrb[0].mxu0 %v895
      %v1023 = vpop.f32.mrb[0].mxu0
      %v1024 = vadd.f32 %v925, %v1023
      %v1025 = vpop.f32.mrb[0].mxu0
      %1026 = vmatprep.mubr.f32.mxu0 0.0
      %1027 = vmatmul.mubr.f32.gmra.mrb[0].mxu0 %v896
      %v1028 = vpop.f32.mrb[0].mxu0
      %v1029 = vadd.f32 %v925, %v1028
      %v1030 = vpop.f32.mrb[0].mxu0
      %1031 = vmatprep.mubr.f32.mxu0 0.0
      %1032 = vmatmul.mubr.f32.gmra.mrb[0].mxu0 %v897
      %v1033 = vpop.f32.mrb[0].mxu0
      %v1034 = vadd.f32 %v925, %v1033
      %v1035 = vpop.f32.mrb[0].mxu0
      %1036 = vmatprep.mubr.f32.mxu0 0.0
      %1037 = vmatmul.mubr.f32.gmra.mrb[0].mxu0 %v898
      %v1038 = vpop.f32.mrb[0].mxu0
      %v1039 = vadd.f32 %v925, %v1038
      %v1040 = vpop.f32.mrb[0].mxu0
      %1041 = vmatprep.mubr.f32.mxu0 0.0
      %1042 = vmatmul.mubr.f32.gmra.mrb[0].mxu0 %v899
      %v1043 = vpop.f32.mrb[0].mxu0
      %v1044 = vadd.f32 %v925, %v1043
      %v1045 = vpop.f32.mrb[0].mxu0
      %1046 = vmatprep.mubr.f32.mxu0 0.0
      %1047 = vmatmul.mubr.f32.gmra.mrb[0].mxu0 %v900
      %v1048 = vpop.f32.mrb[0].mxu0
      %v1049 = vadd.f32 %v925, %v1048
      %v1050 = vpop.f32.mrb[0].mxu0
      %1051 = vmatprep.mubr.f32.mxu0 0.0
      %1052 = vmatmul.mubr.f32.gmra.mrb[0].mxu0 %v901
      %v1053 = vpop.f32.mrb[0].mxu0
      %v1054 = vadd.f32 %v925, %v1053
      %v1055 = vpop.f32.mrb[0].mxu0
      %1056 = vmatprep.mubr.f32.mxu0 0.0
      %1057 = vmatmul.mubr.f32.gmra.mrb[0].mxu0 %v902
      %v1058 = vpop.f32.mrb[0].mxu0
      %v1059 = vadd.f32 %v925, %v1058
      %v1060 = vpop.f32.mrb[0].mxu0
      %1061 = vmatprep.mubr.f32.mxu0 0.0
      %1062 = vmatmul.mubr.f32.gmra.mrb[0].mxu0 %v903
      %v1063 = vpop.f32.mrb[0].mxu0
      %v1064 = vadd.f32 %v925, %v1063
      %v1065 = vpop.f32.mrb[0].mxu0
      %1066 = vmatprep.mubr.f32.mxu0 0.0
      %1067 = vmatmul.mubr.f32.gmra.mrb[0].mxu0 %v904
      %v1068 = vpop.f32.mrb[0].mxu0
      %v1069 = vadd.f32 %v925, %v1068
      %v1070 = vpop.f32.mrb[0].mxu0
      %1071 = vdwg.mxu0
      %v1072 = vxor.u32 %v994, 2147483648
      %v1073 = vxor.u32 %v999, 2147483648
      %v1074 = vxor.u32 %v1004, 2147483648
      %v1075 = vxor.u32 %v1009, 2147483648
      %v1076 = vxor.u32 %v1014, 2147483648
      %v1077 = vxor.u32 %v1019, 2147483648
      %v1078 = vxor.u32 %v1024, 2147483648
      %v1079 = vxor.u32 %v1029, 2147483648
      %v1080 = vxor.u32 %v1034, 2147483648
      %v1081 = vxor.u32 %v1039, 2147483648
      %v1082 = vxor.u32 %v1044, 2147483648
      %v1083 = vxor.u32 %v1049, 2147483648
      %v1084 = vxor.u32 %v1054, 2147483648
      %v1085 = vxor.u32 %v1059, 2147483648
      %v1086 = vxor.u32 %v1064, 2147483648
      %v1087 = vxor.u32 %v1069, 2147483648
      %v1088 = vmul.f32 %v1072, 1.442695
      %v1089 = vpow.pop %v1088
      %v1090 = vmul.f32 %v1073, 1.442695
      %v1091 = vpow.pop %v1090
      %v1092 = vmul.f32 %v1074, 1.442695
      %v1093 = vpow.pop %v1092
      %v1094 = vmul.f32 %v1075, 1.442695
      %v1095 = vpow.pop %v1094
      %v1096 = vmul.f32 %v1076, 1.442695
      %v1097 = vpow.pop %v1096
      %v1098 = vmul.f32 %v1077, 1.442695
      %v1099 = vpow.pop %v1098
      %v1100 = vmul.f32 %v1078, 1.442695
      %v1101 = vpow.pop %v1100
      %v1102 = vmul.f32 %v1079, 1.442695
      %v1103 = vpow.pop %v1102
      %v1104 = vmul.f32 %v1080, 1.442695
      %v1105 = vpow.pop %v1104
      %v1106 = vmul.f32 %v1081, 1.442695
      %v1107 = vpow.pop %v1106
      %v1108 = vmul.f32 %v1082, 1.442695
      %v1109 = vpow.pop %v1108
      %v1110 = vmul.f32 %v1083, 1.442695
      %v1111 = vpow.pop %v1110
      %v1112 = vmul.f32 %v1084, 1.442695
      %v1113 = vpow.pop %v1112
      %v1114 = vmul.f32 %v1085, 1.442695
      %v1115 = vpow.pop %v1114
      %v1116 = vmul.f32 %v1086, 1.442695
      %v1117 = vpow.pop %v1116
      %v1118 = vmul.f32 %v1087, 1.442695
      %v1119 = vpow.pop %v1118
      %v1120 = vadd.f32 %v1089, 1.0
      %v1121 = vadd.f32 %v1091, 1.0
      %v1122 = vadd.f32 %v1093, 1.0
      %v1123 = vadd.f32 %v1095, 1.0
      %v1124 = vadd.f32 %v1097, 1.0
      %v1125 = vadd.f32 %v1099, 1.0
      %v1126 = vadd.f32 %v1101, 1.0
      %v1127 = vadd.f32 %v1103, 1.0
      %v1128 = vadd.f32 %v1105, 1.0
      %v1129 = vadd.f32 %v1107, 1.0
      %v1130 = vadd.f32 %v1109, 1.0
      %v1131 = vadd.f32 %v1111, 1.0
      %v1132 = vadd.f32 %v1113, 1.0
      %v1133 = vadd.f32 %v1115, 1.0
      %v1134 = vadd.f32 %v1117, 1.0
      %v1135 = vadd.f32 %v1119, 1.0
      %v1136 = vrcp.pop %v1120
      %v1137 = vmul.f32 1.0, %v1136
      %v1138 = vrcp.pop %v1121
      %v1139 = vmul.f32 1.0, %v1138
      %v1140 = vrcp.pop %v1122
      %v1141 = vmul.f32 1.0, %v1140
      %v1142 = vrcp.pop %v1123
      %v1143 = vmul.f32 1.0, %v1142
      %v1144 = vrcp.pop %v1124
      %v1145 = vmul.f32 1.0, %v1144
      %v1146 = vrcp.pop %v1125
      %v1147 = vmul.f32 1.0, %v1146
      %v1148 = vrcp.pop %v1126
      %v1149 = vmul.f32 1.0, %v1148
      %v1150 = vrcp.pop %v1127
      %v1151 = vmul.f32 1.0, %v1150
      %v1152 = vrcp.pop %v1128
      %v1153 = vmul.f32 1.0, %v1152
      %v1154 = vrcp.pop %v1129
      %v1155 = vmul.f32 1.0, %v1154
      %v1156 = vrcp.pop %v1130
      %v1157 = vmul.f32 1.0, %v1156
      %v1158 = vrcp.pop %v1131
      %v1159 = vmul.f32 1.0, %v1158
      %v1160 = vrcp.pop %v1132
      %v1161 = vmul.f32 1.0, %v1160
      %v1162 = vrcp.pop %v1133
      %v1163 = vmul.f32 1.0, %v1162
      %v1164 = vrcp.pop %v1134
      %v1165 = vmul.f32 1.0, %v1164
      %v1166 = vrcp.pop %v1135
      %v1167 = vmul.f32 1.0, %v1166
      %1168 = vst [vmem:[%s334] sm:$0xff] %v1137
      %1169 = vst [vmem:[%s334 + $0x8] sm:$0xff] %v1139
      %1170 = vst [vmem:[%s334 + $0x10] sm:$0xff] %v1141
      %1171 = vst [vmem:[%s334 + $0x18] sm:$0xff] %v1143
      %1172 = vst [vmem:[%s334 + $0x20] sm:$0xff] %v1145
      %1173 = vst [vmem:[%s334 + $0x28] sm:$0xff] %v1147
      %1174 = vst [vmem:[%s334 + $0x30] sm:$0xff] %v1149
      %1175 = vst [vmem:[%s334 + $0x38] sm:$0xff] %v1151
      %1176 = vst [vmem:[%s334 + $0x40] sm:$0xff] %v1153
      %1177 = vst [vmem:[%s334 + $0x48] sm:$0xff] %v1155
      %1178 = vst [vmem:[%s334 + $0x50] sm:$0xff] %v1157
      %1179 = vst [vmem:[%s334 + $0x58] sm:$0xff] %v1159
      %1180 = vst [vmem:[%s334 + $0x60] sm:$0xff] %v1161
      %1181 = vst [vmem:[%s334 + $0x68] sm:$0xff] %v1163
      %1182 = vst [vmem:[%s334 + $0x70] sm:$0xff] %v1165
      %1183 = vst [vmem:[%s334 + $0x78] sm:$0xff] %v1167
      %s1184 = smul.u32 16, %s20
      %p1185 = scmp.lt.s32.totalorder %s1184, 31
      %s1186 = scalar_select %p1185, %s1184, 31
      %s1187 = smul.addr %s1186, 8
      %s1188 = scalar_lea.vmem %s9, %s1187
      // Predicated region
      $region57: #{autoencoder_forward.1} parent=55 // pred_check
        %p1189 = pneg %p232
      $region58: #{autoencoder_forward.1} parent=55 // pred_check_branch
        %1191 = sbr.rel (%p1189) target = $region60
      $region59: #{autoencoder_forward.1} parent=55 // pred_region
        %s1192 = smul.u32 16, %s20
      $region60: #{autoencoder_forward.1} parent=55 // pred_fallthru
        _
    $region56: #{autoencoder_forward.1} parent=5 // pred_fallthru
      _
    %p1193 = scmp.le.s32.totalorder 2, %s15
    // Predicated region
    $region61: #{autoencoder_forward.1} parent=5 // pred_check
      %p1194 = pneg %p1193
    $region62: #{autoencoder_forward.1} parent=5 // pred_check_branch
      %1196 = sbr.rel (%p1194) target = $region64
    $region63: #{autoencoder_forward.1} parent=5 // pred_region
      %s1197 = ssub.s32 %s15, 2
      // Predicated region
      $region65: #{autoencoder_forward.1} parent=63 // pred_check
        %p1198 = pneg %p238
      $region66: #{autoencoder_forward.1} parent=63 // pred_check_branch
        %1200 = sbr.rel (%p1198) target = $region68
      $region67: #{autoencoder_forward.1} parent=63 // pred_region
        %s1201 = smul.u32 16, %s21
        %p1202 = scmp.lt.s32.totalorder %s1201, 31
        %s1203 = scalar_select %p1202, %s1201, 31
        %s1204 = smul.addr %s1203, 8
        %s1205 = scalar_lea.vmem %s9, %s1204
      $region68: #{autoencoder_forward.1} parent=63 // pred_fallthru
        _
    $region64: #{autoencoder_forward.1} parent=5 // pred_fallthru
      _
  $region6: #{autoencoder_forward.1} parent=0 // loop_footer
    %s19 = sadd.s32 1, %s15
  $region7: #{autoencoder_forward.1} parent=0 // loop_footer_branch
    %14 = sbr.rel target = $region3
  $region8: #{autoencoder_forward.1} parent=0 // loop_exit
    _

</llo_original>
